<compile_context>
chip_gen: v7x
topology: tpu7x:2x2x1
jax: 0.10.0
libtpu: 0.0.40
codegen_flags: <defaults>
</compile_context>

<pallas_src>
import jax
import jax.numpy as jnp
import numpy as np
from jax.experimental import pallas as pl
from jax.experimental.pallas import tpu as pltpu

C_IN = 28      # Conv1d in_channels
C_OUT = 64     # Conv1d out_channels == hidden_size
KSIZE = 3      # Conv1d kernel_size
HIDDEN = 64    # fc in_features


# -------------------- fused Pallas kernel --------------------

def fused_conv_fc_kernel(x_ref, w_ref, cb_ref, fw_ref, fb_ref, o_ref):
    # x_ref : (1, C_IN*K)     last receptive-field window of batch 0 (ci-major, k-minor)
    # w_ref : (C_IN*K, C_OUT) conv weight, taps folded into the contraction dim
    # cb_ref: (1, C_OUT)      conv bias
    # fw_ref: (1, C_OUT)      fc weight
    # fb_ref: (1, 1)          fc bias
    # o_ref : (1, 1)          scalar prediction
    row = jnp.dot(x_ref[...], w_ref[...],
                  preferred_element_type=jnp.float32) + cb_ref[...]     # (1, C_OUT)
    pred = jnp.sum(row * fw_ref[...])                                   # fc dot (XLU reduce)
    o_ref[...] = jnp.reshape(pred, (1, 1)) + fb_ref[...]


def fused_forward_pallas(x_win, w_flat, conv_b2, fc_w2, fc_b2):
    """Single launch: conv (last window only) + fc, returns (1, 1)."""
    vmem = pl.BlockSpec(memory_space=pltpu.MemorySpace.VMEM)
    return pl.pallas_call(
        fused_conv_fc_kernel,
        out_shape=jax.ShapeDtypeStruct((1, 1), jnp.float32),
        in_specs=[vmem, vmem, vmem, vmem, vmem],
        out_specs=vmem,
    )(x_win, w_flat, conv_b2, fc_w2, fc_b2)


# -------------------- wrappers --------------------

def prepare_params(conv_w, conv_b, fc_w, fc_b):
    """One-time constant reshapes (hoisted out of the per-call path)."""
    # conv_w: (C_OUT, C_IN, K) -> (C_IN*K, C_OUT), flattening (ci, k) row-major
    w_flat = jnp.transpose(conv_w.reshape(C_OUT, C_IN * KSIZE))          # (84, 64)
    return (w_flat,
            conv_b.reshape(1, C_OUT),
            fc_w.reshape(1, HIDDEN),
            fc_b.reshape(1, 1))


@jax.jit
def cnn_forward(x_ncl, w_flat, conv_b2, fc_w2, fc_b2):
    """Reproduces CNN.forward. x_ncl: (N, C_IN, L); N must be 2 (tuple unpack)."""
    assert x_ncl.shape[0] == 2, "`out, _ = self.cnn(x)` requires batch size exactly 2"
    L = x_ncl.shape[2]
    # Only conv_out[0, :, -1] is used -> slice the last receptive-field window of
    # batch element 0 and flatten (ci, k) row-major to match w_flat's layout.
    x_win = x_ncl[0, :, L - KSIZE:].reshape(1, C_IN * KSIZE)             # (1, 84)
    pred = fused_forward_pallas(x_win, w_flat, conv_b2, fc_w2, fc_b2)    # (1, 1)
    return pred.reshape(())                                              # pred.squeeze()


# -------------------- pure-JAX reference --------------------

def cnn_forward_ref(x_ncl, conv_w, conv_b, fc_w, fc_b):
    n, _, l = x_ncl.shape
    l_out = l - KSIZE + 1
    # conv_out[n, co, t] = sum_{ci,k} x[n, ci, t+k] * w[co, ci, k] + b[co]
    conv_out = jnp.stack([
        jnp.einsum("ncl,ocl->no", x_ncl[:, :, t:t + KSIZE], conv_w) + conv_b
        for t in range(l_out)
    ], axis=-1)                                       # (N, C_OUT, L_out)
    out = conv_out[0]                                 # `out, _ = cnn(x)` keeps element 0
    out = out[:, -1]                                  # (C_OUT,)
    pred = fc_w @ out + fc_b                          # (1,)
    return pred.squeeze()


# -------------------- main --------------------

if __name__ == "__main__":
    key = jax.random.PRNGKey(0)
    k_x, k_cw, k_cb, k_fw, k_fb = jax.random.split(key, 5)

    N, L = 2, 16
    x = jax.random.normal(k_x, (N, C_IN, L), dtype=jnp.float32)

    # Deterministic parameter init (PyTorch-like uniform bounds).
    conv_bound = 1.0 / np.sqrt(C_IN * KSIZE)
    conv_w = jax.random.uniform(k_cw, (C_OUT, C_IN, KSIZE), jnp.float32,
                                -conv_bound, conv_bound)
    conv_b = jax.random.uniform(k_cb, (C_OUT,), jnp.float32, -conv_bound, conv_bound)

    fc_bound = 1.0 / np.sqrt(HIDDEN)
    fc_w = jax.random.uniform(k_fw, (1, HIDDEN), jnp.float32, -fc_bound, fc_bound)
    fc_b = jax.random.uniform(k_fb, (1,), jnp.float32, -fc_bound, fc_bound)

    params = prepare_params(conv_w, conv_b, fc_w, fc_b)   # one-time weight prep

    pred = jax.block_until_ready(cnn_forward(x, *params))
    ref = jax.block_until_ready(cnn_forward_ref(x, conv_w, conv_b, fc_w, fc_b))

    np.testing.assert_allclose(np.asarray(pred), np.asarray(ref), rtol=1e-5, atol=1e-5)
    assert pred.shape == ()
    print("KERNEL_OK")
</pallas_src>

<mosaic_0001>
module attributes {stable_mosaic.version = 11 : i64} {
  func.func @fused_conv_fc_kernel(%arg0: memref<1x84xf32, #tpu.memory_space<vmem>>, %arg1: memref<84x64xf32, #tpu.memory_space<vmem>>, %arg2: memref<1x64xf32, #tpu.memory_space<vmem>>, %arg3: memref<1x64xf32, #tpu.memory_space<vmem>>, %arg4: memref<1x1xf32, #tpu.memory_space<vmem>>, %arg5: memref<1x1xf32, #tpu.memory_space<vmem>>) attributes {dimension_semantics = [], scalar_prefetch = 0 : i64, scratch_operands = 0 : i64, tpu.core_type = #tpu.core_type<tc>} {
    %c0 = arith.constant 0 : index
    %c0_0 = arith.constant 0 : index
    %0 = vector.load %arg0[%c0, %c0_0] : memref<1x84xf32, #tpu.memory_space<vmem>>, vector<1x84xf32>
    %c0_1 = arith.constant 0 : index
    %c0_2 = arith.constant 0 : index
    %1 = vector.load %arg1[%c0_1, %c0_2] : memref<84x64xf32, #tpu.memory_space<vmem>>, vector<84x64xf32>
    %cst = arith.constant dense<0.000000e+00> : vector<1x64xf32>
    %2 = tpu.matmul %0, %1, %cst {dimension_numbers = #tpu.dot_dimension_numbers<[1], [0], [0], [1], [0, 0, 1, 1], [], []>} : vector<1x84xf32>, vector<84x64xf32>, vector<1x64xf32> -> vector<1x64xf32>
    %c0_3 = arith.constant 0 : index
    %c0_4 = arith.constant 0 : index
    %3 = vector.load %arg2[%c0_3, %c0_4] : memref<1x64xf32, #tpu.memory_space<vmem>>, vector<1x64xf32>
    %4 = arith.addf %2, %3 : vector<1x64xf32>
    %c0_5 = arith.constant 0 : index
    %c0_6 = arith.constant 0 : index
    %5 = vector.load %arg3[%c0_5, %c0_6] : memref<1x64xf32, #tpu.memory_space<vmem>>, vector<1x64xf32>
    %6 = arith.mulf %4, %5 : vector<1x64xf32>
    %7 = vector.shape_cast %6 : vector<1x64xf32> to vector<1x1x64xf32>
    %cst_7 = arith.constant dense<0.000000e+00> : vector<1xf32>
    %8 = vector.multi_reduction <add>, %7, %cst_7 [1, 2] : vector<1x1x64xf32> to vector<1xf32>
    %9 = vector.shape_cast %8 : vector<1xf32> to vector<1x1x1xf32>
    %10 = vector.extract %9[0, 0, 0] : f32 from vector<1x1x1xf32>
    %11 = vector.broadcast %10 : f32 to vector<1x1xf32>
    %c0_8 = arith.constant 0 : index
    %c0_9 = arith.constant 0 : index
    %12 = vector.load %arg4[%c0_8, %c0_9] : memref<1x1xf32, #tpu.memory_space<vmem>>, vector<1x1xf32>
    %13 = arith.addf %11, %12 : vector<1x1xf32>
    %c0_10 = arith.constant 0 : index
    %c0_11 = arith.constant 0 : index
    %14 = vector.load %arg5[%c0_10, %c0_11] : memref<1x1xf32, #tpu.memory_space<vmem>>, vector<1x1xf32>
    tpu.vector_store %arg5[%c0_10, %c0_11], %13 {strides = array<i32>} : memref<1x1xf32, #tpu.memory_space<vmem>>, vector<1x1xf32>,
    return
  }
}

</mosaic_0001>

<llo_original>
// kernel: squeeze.1
$region0: #{squeeze.1}
  %s0 = inlined_call_operand.vmem [shape: f32[1,28,3], index: 0, kind: input, shape index: {}]
  %s1 = inlined_call_operand.vmem [shape: f32[1,84], index: 1, kind: output, shape index: {}]
  $region1: #{squeeze.1} parent=0
    #allocation0 [shape = 'u8[4096]{0}', space=vmem, size = 0x1000, scoped, tag = 'scoped mem for output reshape']
    %v2 = vld [vmem:[%s0] sm:$0x1]
    %vm3 = vcmask 23552
    %4 = vst.msk [vmem:[#allocation0] sm:$0x1] %vm3, %v2
    %s5 = scalar_lea.vmem %s0, 27
    %v6 = vld [vmem:[%s5] sm:$0x1]
    %7 = vrot.lane.b32.xlu0 %v6, 81
    %v8 = vpop.permute.xlu0 %7
    %vm9 = vcmask 687752
    %10 = vst.msk [vmem:[#allocation0] sm:$0x1] %vm9, %v8
    %s11 = scalar_lea.vmem %s0, 26
    %v12 = vld [vmem:[%s11] sm:$0x1]
    %13 = vrot.lane.b32.xlu0 %v12, 78
    %v14 = vpop.permute.xlu0 %13
    %vm15 = vcmask 663152
    %16 = vst.msk [vmem:[#allocation0] sm:$0x1] %vm15, %v14
    %s17 = scalar_lea.vmem %s0, 25
    %v18 = vld [vmem:[%s17] sm:$0x1]
    %19 = vrot.lane.b32.xlu0 %v18, 75
    %v20 = vpop.permute.xlu0 %19
    %vm21 = vcmask 638552
    %22 = vst.msk [vmem:[#allocation0] sm:$0x1] %vm21, %v20
    %s23 = scalar_lea.vmem %s0, 24
    %v24 = vld [vmem:[%s23] sm:$0x1]
    %25 = vrot.lane.b32.xlu0 %v24, 72
    %v26 = vpop.permute.xlu0 %25
    %vm27 = vcmask 613952
    %28 = vst.msk [vmem:[#allocation0] sm:$0x1] %vm27, %v26
    %s29 = scalar_lea.vmem %s0, 23
    %v30 = vld [vmem:[%s29] sm:$0x1]
    %31 = vrot.lane.b32.xlu0 %v30, 69
    %v32 = vpop.permute.xlu0 %31
    %vm33 = vcmask 589352
    %34 = vst.msk [vmem:[#allocation0] sm:$0x1] %vm33, %v32
    %s35 = scalar_lea.vmem %s0, 22
    %v36 = vld [vmem:[%s35] sm:$0x1]
    %37 = vrot.lane.b32.xlu0 %v36, 66
    %v38 = vpop.permute.xlu0 %37
    %vm39 = vcmask 564752
    %40 = vst.msk [vmem:[#allocation0] sm:$0x1] %vm39, %v38
    %s41 = scalar_lea.vmem %s0, 21
    %v42 = vld [vmem:[%s41] sm:$0x1]
    %43 = vrot.lane.b32.xlu0 %v42, 63
    %v44 = vpop.permute.xlu0 %43
    %vm45 = vcmask 540152
    %46 = vst.msk [vmem:[#allocation0] sm:$0x1] %vm45, %v44
    %s47 = scalar_lea.vmem %s0, 20
    %v48 = vld [vmem:[%s47] sm:$0x1]
    %49 = vrot.lane.b32.xlu0 %v48, 60
    %v50 = vpop.permute.xlu0 %49
    %vm51 = vcmask 515552
    %52 = vst.msk [vmem:[#allocation0] sm:$0x1] %vm51, %v50
    %s53 = scalar_lea.vmem %s0, 19
    %v54 = vld [vmem:[%s53] sm:$0x1]
    %55 = vrot.lane.b32.xlu0 %v54, 57
    %v56 = vpop.permute.xlu0 %55
    %vm57 = vcmask 490952
    %58 = vst.msk [vmem:[#allocation0] sm:$0x1] %vm57, %v56
    %s59 = scalar_lea.vmem %s0, 18
    %v60 = vld [vmem:[%s59] sm:$0x1]
    %61 = vrot.lane.b32.xlu0 %v60, 54
    %v62 = vpop.permute.xlu0 %61
    %vm63 = vcmask 466352
    %64 = vst.msk [vmem:[#allocation0] sm:$0x1] %vm63, %v62
    %s65 = scalar_lea.vmem %s0, 17
    %v66 = vld [vmem:[%s65] sm:$0x1]
    %67 = vrot.lane.b32.xlu0 %v66, 51
    %v68 = vpop.permute.xlu0 %67
    %vm69 = vcmask 441752
    %70 = vst.msk [vmem:[#allocation0] sm:$0x1] %vm69, %v68
    %s71 = scalar_lea.vmem %s0, 16
    %v72 = vld [vmem:[%s71] sm:$0x1]
    %73 = vrot.lane.b32.xlu0 %v72, 48
    %v74 = vpop.permute.xlu0 %73
    %vm75 = vcmask 417152
    %76 = vst.msk [vmem:[#allocation0] sm:$0x1] %vm75, %v74
    %s77 = scalar_lea.vmem %s0, 15
    %v78 = vld [vmem:[%s77] sm:$0x1]
    %79 = vrot.lane.b32.xlu0 %v78, 45
    %v80 = vpop.permute.xlu0 %79
    %vm81 = vcmask 392552
    %82 = vst.msk [vmem:[#allocation0] sm:$0x1] %vm81, %v80
    %s83 = scalar_lea.vmem %s0, 14
    %v84 = vld [vmem:[%s83] sm:$0x1]
    %85 = vrot.lane.b32.xlu0 %v84, 42
    %v86 = vpop.permute.xlu0 %85
    %vm87 = vcmask 367952
    %88 = vst.msk [vmem:[#allocation0] sm:$0x1] %vm87, %v86
    %s89 = scalar_lea.vmem %s0, 13
    %v90 = vld [vmem:[%s89] sm:$0x1]
    %91 = vrot.lane.b32.xlu0 %v90, 39
    %v92 = vpop.permute.xlu0 %91
    %vm93 = vcmask 343352
    %94 = vst.msk [vmem:[#allocation0] sm:$0x1] %vm93, %v92
    %s95 = scalar_lea.vmem %s0, 12
    %v96 = vld [vmem:[%s95] sm:$0x1]
    %97 = vrot.lane.b32.xlu0 %v96, 36
    %v98 = vpop.permute.xlu0 %97
    %vm99 = vcmask 318752
    %100 = vst.msk [vmem:[#allocation0] sm:$0x1] %vm99, %v98
    %s101 = scalar_lea.vmem %s0, 11
    %v102 = vld [vmem:[%s101] sm:$0x1]
    %103 = vrot.lane.b32.xlu0 %v102, 33
    %v104 = vpop.permute.xlu0 %103
    %vm105 = vcmask 294152
    %106 = vst.msk [vmem:[#allocation0] sm:$0x1] %vm105, %v104
    %s107 = scalar_lea.vmem %s0, 10
    %v108 = vld [vmem:[%s107] sm:$0x1]
    %109 = vrot.lane.b32.xlu0 %v108, 30
    %v110 = vpop.permute.xlu0 %109
    %vm111 = vcmask 269552
    %112 = vst.msk [vmem:[#allocation0] sm:$0x1] %vm111, %v110
    %s113 = scalar_lea.vmem %s0, 9
    %v114 = vld [vmem:[%s113] sm:$0x1]
    %115 = vrot.lane.b32.xlu0 %v114, 27
    %v116 = vpop.permute.xlu0 %115
    %vm117 = vcmask 244952
    %118 = vst.msk [vmem:[#allocation0] sm:$0x1] %vm117, %v116
    %s119 = scalar_lea.vmem %s0, 8
    %v120 = vld [vmem:[%s119] sm:$0x1]
    %121 = vrot.lane.b32.xlu0 %v120, 24
    %v122 = vpop.permute.xlu0 %121
    %vm123 = vcmask 220352
    %124 = vst.msk [vmem:[#allocation0] sm:$0x1] %vm123, %v122
    %s125 = scalar_lea.vmem %s0, 7
    %v126 = vld [vmem:[%s125] sm:$0x1]
    %127 = vrot.lane.b32.xlu0 %v126, 21
    %v128 = vpop.permute.xlu0 %127
    %vm129 = vcmask 195752
    %130 = vst.msk [vmem:[#allocation0] sm:$0x1] %vm129, %v128
    %s131 = scalar_lea.vmem %s0, 6
    %v132 = vld [vmem:[%s131] sm:$0x1]
    %133 = vrot.lane.b32.xlu0 %v132, 18
    %v134 = vpop.permute.xlu0 %133
    %vm135 = vcmask 171152
    %136 = vst.msk [vmem:[#allocation0] sm:$0x1] %vm135, %v134
    %s137 = scalar_lea.vmem %s0, 5
    %v138 = vld [vmem:[%s137] sm:$0x1]
    %139 = vrot.lane.b32.xlu0 %v138, 15
    %v140 = vpop.permute.xlu0 %139
    %vm141 = vcmask 146552
    %142 = vst.msk [vmem:[#allocation0] sm:$0x1] %vm141, %v140
    %s143 = scalar_lea.vmem %s0, 4
    %v144 = vld [vmem:[%s143] sm:$0x1]
    %145 = vrot.lane.b32.xlu0 %v144, 12
    %v146 = vpop.permute.xlu0 %145
    %vm147 = vcmask 121952
    %148 = vst.msk [vmem:[#allocation0] sm:$0x1] %vm147, %v146
    %s149 = scalar_lea.vmem %s0, 3
    %v150 = vld [vmem:[%s149] sm:$0x1]
    %151 = vrot.lane.b32.xlu0 %v150, 9
    %v152 = vpop.permute.xlu0 %151
    %vm153 = vcmask 97352
    %154 = vst.msk [vmem:[#allocation0] sm:$0x1] %vm153, %v152
    %s155 = scalar_lea.vmem %s0, 2
    %v156 = vld [vmem:[%s155] sm:$0x1]
    %157 = vrot.lane.b32.xlu0 %v156, 6
    %v158 = vpop.permute.xlu0 %157
    %vm159 = vcmask 72752
    %160 = vst.msk [vmem:[#allocation0] sm:$0x1] %vm159, %v158
    %s161 = scalar_lea.vmem %s0, 1
    %v162 = vld [vmem:[%s161] sm:$0x1]
    %163 = vrot.lane.b32.xlu0 %v162, 3
    %v164 = vpop.permute.xlu0 %163
    %vm165 = vcmask 48152
    %166 = vst.msk [vmem:[#allocation0] sm:$0x1] %vm165, %v164
    %s168 = sshllo.u32 0, 1
    %v170 = vld [vmem:[#allocation0] sm:%s168]
    %s171 = sshllo.u32 0, 1
    %172 = vst [vmem:[%s1] sm:%s171] %v170

// kernel: cnn_forward.1
$region0: #{cnn_forward.1}
  #allocation0 [shape = 'u32[]', space=smem, size = 0x4, offset = 0x4, fixed_abs, tag = 'smem constant byte address 0x4 - core index']
  #allocation1 [shape = 'u32[144,128]{1,0:T(1,128)}', space=vmem, size = 0x12000, scoped, tag = 'internal scratch']
  #allocation2 [shape = 'f32[1,1]{1,0:T(1,128)S(1)}', space=vmem, size = 0x200, scoped, tag = 'scoped memory for cnn_forward.1']
  %s0 = inlined_call_operand.vmem [shape: f32[1,84], index: 0, kind: input, shape index: {}]
  %s1 = inlined_call_operand.vmem [shape: f32[84,64], index: 1, kind: input, shape index: {}]
  %s2 = inlined_call_operand.vmem [shape: f32[1,64], index: 2, kind: input, shape index: {}]
  %s3 = inlined_call_operand.vmem [shape: f32[1,64], index: 3, kind: input, shape index: {}]
  %s4 = inlined_call_operand.<no memory space> [shape: f32[1,1], index: 4, kind: input, shape index: {}]
  %s5 = inlined_call_operand.hbm [shape: f32[1,1], index: 5, kind: output, shape index: {}]
  %s6 = sld [smem:[#allocation0]]
  $region30: #{cnn_forward.1} parent=0
    _
  %s8 = ssub.s32 1, %s6
  %s9 = scalar_select 0, %s8, %s6
  %v10 = vstv %s4
  %11 = vst [vmem:[#allocation2] sm:$0x1] %v10
  $region1: #{cnn_forward.1} parent=0
    #allocation3 [shape = 'u8[512]{0}', space=vmem, size = 0x400, scoped, tag = 'output window, operand 0, single buffered']
    #allocation4 [shape = 's32[1]{0}', space=sflag, size = 0x4, scoped, tag = 'scoped memory for cnn_forward.1']
    %12 = vsyncpa [#allocation4], 0
    // Predicated region
    $region2: #{cnn_forward.1} parent=1 // pred_check
      _
    $region3: #{cnn_forward.1} parent=1 // pred_check_branch
      %14 = sbr.rel (0) target = $region5
    $region4: #{cnn_forward.1} parent=1 // pred_region
      _
    $region5: #{cnn_forward.1} parent=1 // pred_fallthru
      _
    // Predicated region
    $region6: #{cnn_forward.1} parent=1 // pred_check
      _
    $region7: #{cnn_forward.1} parent=1 // pred_check_branch
      %16 = sbr.rel (0) target = $region9
    $region8: #{cnn_forward.1} parent=1 // pred_region
      _
    $region9: #{cnn_forward.1} parent=1 // pred_fallthru
      _
    // Predicated region
    $region10: #{cnn_forward.1} parent=1 // pred_check
      _
    $region11: #{cnn_forward.1} parent=1 // pred_check_branch
      %18 = sbr.rel (0) target = $region13
    $region12: #{cnn_forward.1} parent=1 // pred_region
      _
    $region13: #{cnn_forward.1} parent=1 // pred_fallthru
      _
    // Predicated region
    $region14: #{cnn_forward.1} parent=1 // pred_check
      _
    $region15: #{cnn_forward.1} parent=1 // pred_check_branch
      %20 = sbr.rel (0) target = $region17
    $region16: #{cnn_forward.1} parent=1 // pred_region
      _
    $region17: #{cnn_forward.1} parent=1 // pred_fallthru
      _
    // Predicated region
    $region18: #{cnn_forward.1} parent=1 // pred_check
      _
    $region19: #{cnn_forward.1} parent=1 // pred_check_branch
      %22 = sbr.rel (0) target = $region21
    $region20: #{cnn_forward.1} parent=1 // pred_region
      _
    $region21: #{cnn_forward.1} parent=1 // pred_fallthru
      _
    %v23 = vld [vmem:[%s0] sm:$0x1]
    %v24 = vld [vmem:[%s1] sm:$0xff]
    %v25 = vld [vmem:[%s1 + $0x8] sm:$0xff]
    %v26 = vld [vmem:[%s1 + $0x10] sm:$0xff]
    %v27 = vld [vmem:[%s1 + $0x18] sm:$0xff]
    %v28 = vld [vmem:[%s1 + $0x20] sm:$0xff]
    %v29 = vld [vmem:[%s1 + $0x28] sm:$0xff]
    %v30 = vld [vmem:[%s1 + $0x30] sm:$0xff]
    %v31 = vld [vmem:[%s1 + $0x38] sm:$0xff]
    %v32 = vld [vmem:[%s1 + $0x40] sm:$0xff]
    %v33 = vld [vmem:[%s1 + $0x48] sm:$0xff]
    %v34 = vld [vmem:[%s1 + $0x50] sm:$0xf]
    %v35 = vld [vmem:[%s2] sm:$0x1]
    %vm36 = vcmask 687104
    %v38 = vsel %vm36, %v23, 0
    %vm40 = vcmask 1043456
    %v42 = vsel %vm40, %v34, 0
    %44 = vmatprep.subr.mxu0 0.0
    %45 = vmatpush1.msra.mxu0 %v24
    %46 = vmatprep.subr.mxu0 0.0
    %47 = vmatpush1.msra.mxu0 %v25
    %48 = vmatprep.subr.mxu0 0.0
    %49 = vmatpush1.msra.mxu0 %v26
    %50 = vmatprep.subr.mxu0 0.0
    %51 = vmatpush1.msra.mxu0 %v27
    %52 = vmatprep.subr.mxu0 0.0
    %53 = vmatpush1.msra.mxu0 %v28
    %54 = vmatprep.subr.mxu0 0.0
    %55 = vmatpush1.msra.mxu0 %v29
    %56 = vmatprep.subr.mxu0 0.0
    %57 = vmatpush1.msra.mxu0 %v30
    %58 = vmatprep.subr.mxu0 0.0
    %59 = vmatpush1.msra.mxu0 %v31
    %60 = vmatprep.subr.mxu0 0.0
    %61 = vmatpush1.msra.mxu0 %v32
    %62 = vmatprep.subr.mxu0 0.0
    %63 = vmatpush1.msra.mxu0 %v33
    %64 = vmatprep.subr.mxu0 0.0
    %65 = vmatpush1.msra.mxu0 %v42
    %66 = vmatprep.subr.mxu0 0.0
    %67 = vmatpush1.msra.mxu0 0.0
    %68 = vmatprep.subr.mxu0 0.0
    %69 = vmatpush1.msra.mxu0 0.0
    %70 = vmatprep.subr.mxu0 0.0
    %71 = vmatpush1.msra.mxu0 0.0
    %72 = vmatprep.subr.mxu0 0.0
    %73 = vmatpush1.msra.mxu0 0.0
    %74 = vmatprep.subr.mxu0 0.0
    %75 = vmatpush1.msra.mxu0 0.0
    %76 = vmatprep.subr.mxu0 0.0
    %77 = vmatpush1.msra.mxu0 0.0
    %78 = vmatprep.subr.mxu0 0.0
    %79 = vmatpush1.msra.mxu0 0.0
    %80 = vmatprep.subr.mxu0 0.0
    %81 = vmatpush1.msra.mxu0 0.0
    %82 = vmatprep.subr.mxu0 0.0
    %83 = vmatpush1.msra.mxu0 0.0
    %84 = vmatprep.subr.mxu0 0.0
    %85 = vmatpush1.msra.mxu0 0.0
    %86 = vmatprep.subr.mxu0 0.0
    %87 = vmatpush1.msra.mxu0 0.0
    %88 = vmatprep.subr.mxu0 0.0
    %89 = vmatpush1.msra.mxu0 0.0
    %90 = vmatprep.subr.mxu0 0.0
    %91 = vmatpush1.msra.mxu0 0.0
    %92 = vmatprep.subr.mxu0 0.0
    %93 = vmatpush1.msra.mxu0 0.0
    %94 = vmatprep.subr.mxu0 0.0
    %95 = vmatpush1.msra.mxu0 0.0
    %96 = vmatprep.subr.mxu0 0.0
    %97 = vmatpush1.msra.mxu0 0.0
    %98 = vmatprep.subr.mxu0 0.0
    %99 = vmatpush1.msra.mxu0 0.0
    %100 = vmatprep.subr.mxu0 0.0
    %101 = vmatpush1.msra.mxu0 0.0
    %102 = vmatprep.subr.mxu0 0.0
    %103 = vmatpush1.msra.mxu0 0.0
    %104 = vmatprep.subr.mxu0 0.0
    %105 = vmatpush1.msra.mxu0 0.0
    %106 = vmatprep.subr.mxu0 0.0
    %107 = vmatpush1.msra.mxu0 0.0
    %108 = vmatprep.mubr.f32.mxu0 0.0
    %109 = vmatmul.mubr.f32.gmra.mrb[0].mxu0 %v38
    %v110 = vpop.f32.mrb[0].mxu0
    %v111 = vadd.f32 %v35, %v110
    %v112 = vpop.f32.mrb[0].mxu0
    %113 = vdwg.mxu0
    %v114 = vld [vmem:[%s3] sm:$0x1]
    %v115 = vmul.f32 %v111, %v114
    %vm116 = vcmask 516096
    %v117 = vsel %vm116, %v115, 0.0
    %118 = vadd.xlane.f32.xlu0 %v117
    %v119 = vpop.xlane.xlu0 %118
    %v120 = vrot.slane %v119, 4
    %v121 = vadd.f32 %v119, %v120
    %v122 = vrot.slane %v121, 2
    %v123 = vadd.f32 %v121, %v122
    %v124 = vrot.slane %v123, 1
    %v125 = vadd.f32 %v123, %v124
    %s126 = vtos %v125
    %v127 = vstv %s126
    %v128 = vld [vmem:[#allocation2] sm:$0x1]
    %v129 = vadd.f32 %v127, %v128
    %vm130 = vcmask 0
    %131 = vst.msk [vmem:[#allocation3] sm:$0x1] %vm130, %v129
    // Predicated region
    $region22: #{cnn_forward.1} parent=1 // pred_check
      _
    $region23: #{cnn_forward.1} parent=1 // pred_check_branch
      %133 = sbr.rel (0) target = $region25
    $region24: #{cnn_forward.1} parent=1 // pred_region
      %s135 = ssub.s32 16, 16
      %136 = vsyncadd [#allocation4], %s135
      %s138 = sshll.u32 [#allocation3], 4
      %s139 = int_to_ptr.vmem [resolvable:$true] %s138
      %141 = dma.vmem_to_hbm [thread:$0]  %s139, 16, %s5, [#allocation4]
    $region25: #{cnn_forward.1} parent=1 // pred_fallthru
      _
    // Predicated region
    $region26: #{cnn_forward.1} parent=1 // pred_check
      _
    $region27: #{cnn_forward.1} parent=1 // pred_check_branch
      %143 = sbr.rel (0) target = $region29
    $region28: #{cnn_forward.1} parent=1 // pred_region
      %144 = dma.done [#allocation4], 16
    $region29: #{cnn_forward.1} parent=1 // pred_fallthru
      _
    %145 = vsyncpa [#allocation4], 1

</llo_original>
